<compile_context>
chip_gen: v5e
topology: v5e:2x2
jax: 0.10.0
libtpu: 0.0.40
codegen_flags: <defaults>
</compile_context>

<pallas_src>
import jax
import jax.numpy as jnp
from jax.experimental import pallas as pl
from jax.experimental.pallas import tpu as pltpu


def _copy_kernel(x_ref, o_ref):
    # Full-tile VMEM copy; lane axis is a multiple of 128 -> unmasked vst.
    o_ref[...] = x_ref[...]


def _sublane_multiple(dtype):
    # Sub-32-bit dtypes pack along sublanes: 8 for f32, 16 for bf16, 32 for int8.
    itemsize = jnp.dtype(dtype).itemsize
    return max(8, 32 // max(itemsize, 1))


def _lane_dense_2d_view(shape):
    """Find (rows, cols) with cols a multiple of 128 by collapsing contiguous
    trailing dims (a free row-major reshape, no relayout). Returns None if no
    such collapse exists."""
    total = 1
    for d in shape:
        total *= d
    cols = 1
    for d in reversed(shape):
        cols *= d
        if cols % 128 == 0:
            return total // cols, cols
    return None


def _pallas_identity_copy(x):
    dtype = x.dtype
    itemsize = jnp.dtype(dtype).itemsize
    sub = _sublane_multiple(dtype)

    view = _lane_dense_2d_view(x.shape)
    if view is None:
        # No 128-lane-aligned trailing collapse exists.  The forward is the
        # identity, so skip the kernel instead of paying pad + copy + slice
        # HBM passes.
        return x
    rows, cols = view
    row_bytes = cols * itemsize

    # ~2 MiB blocks: in + out, double buffered => 4x block bytes = 8 MiB,
    # safe under every chip's default scoped-VMEM limit (16 MiB on v5e).
    TARGET_BLOCK_BYTES = 2 * 1024 * 1024
    full_bytes = rows * row_bytes

    if full_bytes <= TARGET_BLOCK_BYTES:
        # Small input: one full-array block, single grid step (full block_shape
        # is exempt from the (8,128) divisibility rule; no per-step overhead on
        # single-TensorCore v5e/v6e).
        block_rows = rows
    else:
        block_rows = (TARGET_BLOCK_BYTES // row_bytes) // sub * sub
        if block_rows < sub:
            # Even a minimum-height (sub-row) block would exceed the 2 MiB
            # budget; identity semantics -> cheaper to return x untouched.
            return x
        block_rows = min(block_rows, rows)

    n_blocks = pl.cdiv(rows, block_rows)  # partial last block is fine
    x2d = x.reshape(rows, cols)           # contiguous trailing collapse: no relayout

    spec = pl.BlockSpec((block_rows, cols), lambda i: (i, 0))
    y2d = pl.pallas_call(
        _copy_kernel,
        out_shape=jax.ShapeDtypeStruct((rows, cols), dtype),
        grid=(n_blocks,),
        in_specs=[spec],
        out_specs=spec,
        # NOTE: deliberately no input_output_aliases -- x2d is (a view of) a
        # non-donated caller array; aliasing would trigger a defensive copy.
        compiler_params=pltpu.CompilerParams(
            dimension_semantics=("parallel",),  # megacore sharding on v7x
        ),
    )(x2d)
    return y2d.reshape(x.shape)


def positional_encoding_learned_forward(x, embed_weight, *, use_pallas=False):
    """Forward of PositionalEncodingLearned: returns x unchanged.

    `embed_weight` (shape (size, dim)) is the learned nn.Embedding table from
    __init__; it is NOT used in the forward pass (the PyTorch module returns x
    unchanged) and is accepted only for parity with the module signature.

    Default (use_pallas=False) is the zero-cost identity fast path (0 HBM
    passes -- the optimum).  Set use_pallas=True to route the data through the
    Pallas TPU copy kernel (e.g. to exercise / benchmark the kernel).
    """
    del embed_weight  # unused in forward, exactly like the PyTorch module
    if not use_pallas or x.size == 0 or x.ndim == 0:
        return x
    return _pallas_identity_copy(x)


def init_params(key, dim, size=8, dtype=jnp.float32):
    """Deterministic init of the module parameters: nn.Embedding(size, dim).

    PyTorch's nn.Embedding initializes weights ~ N(0, 1).
    """
    embed_weight = jax.random.normal(key, (size, dim), dtype=dtype)
    return {"embed_weight": embed_weight}


if __name__ == "__main__":
    key = jax.random.PRNGKey(0)
    k_param, k_x = jax.random.split(key)

    # Small shapes consistent with the module: dim = channels = 4, size = 8.
    B, C, H, W = 2, 4, 16, 16
    params = init_params(k_param, dim=C, size=8)
    x = jax.random.normal(k_x, (B, C, H, W), dtype=jnp.float32)

    # Fast path (default): identity, no kernel launch, no HBM traffic.
    y_fast = positional_encoding_learned_forward(x, params["embed_weight"])
    y_fast = jax.block_until_ready(y_fast)

    # Pallas path: runs the TPU copy kernel once (H*W = 256 lanes -> single
    # full-array (8, 256) block, one grid step).
    y = positional_encoding_learned_forward(x, params["embed_weight"], use_pallas=True)
    y = jax.block_until_ready(y)

    # Correctness: forward is identity.
    assert y.shape == x.shape and y.dtype == x.dtype
    assert bool(jnp.array_equal(y, x))
    assert bool(jnp.array_equal(y_fast, x))

    print("KERNEL_OK")
</pallas_src>

<mosaic_0001>
module attributes {stable_mosaic.version = 11 : i64} {
  func.func @_copy_kernel(%arg0: i32, %arg1: memref<8x256xf32, #tpu.memory_space<vmem>>, %arg2: memref<8x256xf32, #tpu.memory_space<vmem>>) attributes {dimension_semantics = [#tpu.dimension_semantics<parallel>], iteration_bounds = array<i64: 1>, scalar_prefetch = 0 : i64, scratch_operands = 0 : i64, tpu.core_type = #tpu.core_type<tc>, window_params = [{transform_indices = @transform_0, window_bounds = array<i64: 8, 256>}, {transform_indices = @transform_1, window_bounds = array<i64: 8, 256>}]} {
    %c0 = arith.constant 0 : index
    %c0_0 = arith.constant 0 : index
    %0 = vector.load %arg1[%c0, %c0_0] : memref<8x256xf32, #tpu.memory_space<vmem>>, vector<8x256xf32>
    %c0_1 = arith.constant 0 : index
    %c0_2 = arith.constant 0 : index
    %1 = vector.load %arg2[%c0_1, %c0_2] : memref<8x256xf32, #tpu.memory_space<vmem>>, vector<8x256xf32>
    tpu.vector_store %arg2[%c0_1, %c0_2], %0 {strides = array<i32>} : memref<8x256xf32, #tpu.memory_space<vmem>>, vector<8x256xf32>,
    return
  }
  func.func @transform_0(%arg0: i32) -> (i32, i32) {
    %c0_i32 = arith.constant 0 : i32
    %c0_i32_0 = arith.constant 0 : i32
    return %arg0, %c0_i32 : i32, i32
  }
  func.func @transform_1(%arg0: i32) -> (i32, i32) {
    %c0_i32 = arith.constant 0 : i32
    %c0_i32_0 = arith.constant 0 : i32
    return %arg0, %c0_i32 : i32, i32
  }
}

</mosaic_0001>

<llo_original>
// kernel: tpu_custom_call.1
$region0: #{tpu_custom_call.1}
  #allocation0 [shape = 'u32[]', space=smem, size = 0x4, offset = 0x4, fixed_abs, tag = 'smem constant byte address 0x4 - core index']
  #allocation1 [shape = 'u32[72,128]{1,0:T(1,128)}', space=vmem, size = 0x9000, scoped, tag = 'internal scratch']
  %s0 = inlined_call_operand.hbm [shape: f32[8,256], index: 0, kind: input, shape index: {}]
  %s1 = inlined_call_operand.hbm [shape: f32[8,256], index: 1, kind: output, shape index: {}]
  %s2 = sld [smem:[#allocation0]]
  $region18: #{tpu_custom_call.1} parent=0
    _
  %s4 = ssub.s32 1, %s2
  %s5 = scalar_select 0, %s4, %s2
  $region1: #{tpu_custom_call.1} parent=0
    #allocation2 [shape = 'u8[8192]{0}', space=vmem, size = 0x2000, scoped, tag = 'input window, operand 0, single buffered']
    #allocation3 [shape = 's32[1]{0}', space=sflag, size = 0x4, scoped, tag = 'scoped memory for tpu_custom_call.1']
    #allocation4 [shape = 's32[1]{0}', space=sflag, size = 0x4, scoped, tag = 'scoped memory for tpu_custom_call.1']
    #allocation5 [shape = 'u8[8192]{0}', space=vmem, size = 0x2000, scoped, tag = 'output window, operand 0, single buffered']
    %6 = vsyncpa [#allocation3], 0
    %7 = vsyncpa [#allocation4], 0
    // Predicated region
    $region2: #{tpu_custom_call.1} parent=1 // pred_check
      _
    $region3: #{tpu_custom_call.1} parent=1 // pred_check_branch
      %9 = sbr.rel (0) target = $region5
    $region4: #{tpu_custom_call.1} parent=1 // pred_region
      %11 = vsyncadd [#allocation3], 0
      %s13 = sshll.u32 %s0, 4
      %s14 = int_to_ptr.hbm [resolvable:$true] %s13
      %s15 = sshll.u32 [#allocation2], 4
      %s16 = int_to_ptr.vmem [resolvable:$true] %s15
      %18 = dma.hbm_to_vmem [thread:$0]  %s14, 256, %s16, [#allocation3]
    $region5: #{tpu_custom_call.1} parent=1 // pred_fallthru
      _
    // Predicated region
    $region6: #{tpu_custom_call.1} parent=1 // pred_check
      _
    $region7: #{tpu_custom_call.1} parent=1 // pred_check_branch
      %20 = sbr.rel (0) target = $region9
    $region8: #{tpu_custom_call.1} parent=1 // pred_region
      %22 = dma.done [#allocation3], 256
    $region9: #{tpu_custom_call.1} parent=1 // pred_fallthru
      _
    %v23 = vld [vmem:[#allocation2] sm:$0xff]
    %v24 = vld [vmem:[#allocation2 + $0x8] sm:$0xff]
    %25 = vst [vmem:[#allocation5] sm:$0xff] %v23
    %26 = vst [vmem:[#allocation5 + $0x8] sm:$0xff] %v24
    // Predicated region
    $region10: #{tpu_custom_call.1} parent=1 // pred_check
      _
    $region11: #{tpu_custom_call.1} parent=1 // pred_check_branch
      %28 = sbr.rel (0) target = $region13
    $region12: #{tpu_custom_call.1} parent=1 // pred_region
      %30 = vsyncadd [#allocation4], 0
      %s32 = sshll.u32 [#allocation5], 4
      %s33 = int_to_ptr.vmem [resolvable:$true] %s32
      %s34 = sshll.u32 %s1, 4
      %s35 = int_to_ptr.hbm [resolvable:$true] %s34
      %37 = dma.vmem_to_hbm [thread:$0]  %s33, 256, %s35, [#allocation4]
    $region13: #{tpu_custom_call.1} parent=1 // pred_fallthru
      _
    // Predicated region
    $region14: #{tpu_custom_call.1} parent=1 // pred_check
      _
    $region15: #{tpu_custom_call.1} parent=1 // pred_check_branch
      %39 = sbr.rel (0) target = $region17
    $region16: #{tpu_custom_call.1} parent=1 // pred_region
      %41 = dma.done [#allocation4], 256
    $region17: #{tpu_custom_call.1} parent=1 // pred_fallthru
      _
    %42 = vsyncpa [#allocation3], 1
    %43 = vsyncpa [#allocation4], 1

</llo_original>
